<compile_context>
chip_gen: v7x
topology: tpu7x:2x2x1
jax: 0.10.0
libtpu: 0.0.40
codegen_flags: <defaults>
</compile_context>

<pallas_src>
import jax
import jax.numpy as jnp
import numpy as np
from jax import lax
from jax.experimental import pallas as pl
from jax.experimental.pallas import tpu as pltpu


def _round_up(x, m):
    return (x + m - 1) // m * m


def _pad_gate_cols(w, h_dim, hp):
    """Map PyTorch gate layout [i|f|g|o] (4*h_dim cols) -> lane-aligned 4*hp cols."""
    out = jnp.zeros(w.shape[:-1] + (4 * hp,), w.dtype)
    for g in range(4):
        out = out.at[..., g * hp:g * hp + h_dim].set(
            w[..., g * h_dim:(g + 1) * h_dim])
    return out


def _tile_vmem_bytes(tile_b, t_steps, e_dim, hp):
    """Rough per-tile VMEM requirement (double-buffered inputs + scratch)."""
    x_in = 2 * (t_steps * tile_b * e_dim * 2)          # bf16 x tile, 2 buffers
    gx = t_steps * tile_b * 4 * hp * 4                 # hoisted projection scratch
    state = 2 * tile_b * hp * 4                        # h, c
    out = 2 * tile_b * hp * 4                          # out, 2 buffers
    weights = 2 * (e_dim * 4 * hp * 2 + hp * 4 * hp * 4 + 4 * hp * 4)
    lens = 2 * tile_b * 4
    return x_in + gx + state + out + weights + lens


def lstm_last_kernel(maxlen_ref, x_ref, len_ref, wih_ref, whh_ref, b_ref,
                     out_ref, gx_sc, h_sc, c_sc):
    """Single-layer LSTM over time; emits hidden state at step len-1.

    maxlen_ref: (num_tiles,) i32 SMEM  per-tile max sequence length (prefetch)
    x_ref:      (T*B, E)     bf16      time-major within the tile (row = t*B + b)
    len_ref:    (B, 1)       i32       valid lengths (>= 1)
    wih_ref:    (E, 4*Hp)    bf16      W_ih^T, gate order [i,f,g,o], lane-padded
    whh_ref:    (Hp, 4*Hp)   f32       W_hh^T, lane-padded
    b_ref:      (1, 4*Hp)    f32       b_ih + b_hh, lane-padded
    out_ref:    (B, Hp)      f32       hidden state at t = len-1
    gx_sc:      (T*B, 4*Hp)  f32       hoisted input projection
    h_sc/c_sc:  (B, Hp)      f32       recurrent state
    """
    tile_b, hp = h_sc.shape

    # Hoisted input projection: one big bf16 matmul on the MXU (outside the
    # serial recurrence), bias folded in.
    gx_sc[...] = (
        jnp.dot(x_ref[...], wih_ref[...], preferred_element_type=jnp.float32)
        + b_ref[...]
    )

    h_sc[...] = jnp.zeros_like(h_sc)
    c_sc[...] = jnp.zeros_like(c_sc)
    lengths = len_ref[...]                      # (B, 1) int32
    t_stop = maxlen_ref[pl.program_id(0)]       # dynamic trip count (<= T)

    def body(t, carry):
        row0 = pl.multiple_of(t * tile_b, tile_b)
        gates = gx_sc[pl.ds(row0, tile_b), :] + jnp.dot(
            h_sc[...], whh_ref[...], preferred_element_type=jnp.float32)
        # 128-lane aligned gate slices (whole-vreg moves, no sublane extraction).
        i_g = jax.nn.sigmoid(gates[:, 0 * hp:1 * hp])
        f_g = jax.nn.sigmoid(gates[:, 1 * hp:2 * hp])
        g_g = jnp.tanh(gates[:, 2 * hp:3 * hp])
        o_g = jax.nn.sigmoid(gates[:, 3 * hp:4 * hp])
        c_new = f_g * c_sc[...] + i_g * g_g
        h_new = o_g * jnp.tanh(c_new)
        # Freeze h/c once a row is past its valid length; final h_sc is then the
        # hidden state at t = len-1 (pack_padded_sequence semantics).
        active = t < lengths                    # (B, 1) bool
        c_sc[...] = jnp.where(active, c_new, c_sc[...])
        h_sc[...] = jnp.where(active, h_new, h_sc[...])
        return carry

    lax.fori_loop(0, t_stop, body, 0)
    out_ref[...] = h_sc[...]


def embednet2d_forward(X_ids, X_num_2d_tokens, params, *,
                       vmem_budget_bytes=12 << 20):
    """X_ids: [m, V_size, T] int32, X_num_2d_tokens: [m, V_size] int
       -> [m, V_size, h_dim] f32"""
    E_table = params["E"]              # (vocab, E_dim) f32
    wih_t = params["wih_t"]            # (E_dim, 4H) f32
    whh_t = params["whh_t"]            # (H, 4H) f32
    bias = params["bias"]              # (1, 4H) f32

    m, v_size, T = X_ids.shape
    big_m = m * v_size
    h_dim = whh_t.shape[0]
    e_dim = E_table.shape[1]
    hp = _round_up(h_dim, 128)

    # --- batch tiling (VMEM-budgeted; multiples of 16 for bf16 sublane packing)
    bm16 = _round_up(big_m, 16)
    tile_b = min(bm16, 256)
    while tile_b > 16 and _tile_vmem_bytes(tile_b, T, e_dim, hp) > vmem_budget_bytes:
        tile_b -= 16
    bm_pad = _round_up(big_m, tile_b)
    num_tiles = bm_pad // tile_b

    # --- ids / lengths prep (int32 only; no HBM round-trip of the f32 tensor)
    ids_flat = X_ids.reshape(big_m, T).astype(jnp.int32)
    lens = jnp.clip(X_num_2d_tokens.reshape(big_m).astype(jnp.int32), 1, T)
    pad_rows = bm_pad - big_m
    ids_pad = jnp.pad(ids_flat, ((0, pad_rows), (0, 0)))
    lens_pad = jnp.pad(lens, (0, pad_rows), constant_values=1)

    # Rearrange ids to (tile, time, batch-in-tile) then gather -> the kernel's
    # x block is a contiguous (T*tile_b, E) slab, already time-major per tile.
    ids_tiled = ids_pad.reshape(num_tiles, tile_b, T).transpose(0, 2, 1)
    x2d = jnp.take(E_table.astype(jnp.bfloat16), ids_tiled.reshape(-1), axis=0)

    lens_col = lens_pad.reshape(bm_pad, 1)
    maxlen = lens_pad.reshape(num_tiles, tile_b).max(axis=1).astype(jnp.int32)

    # --- lane-aligned (gate-padded) weights
    wih_p = _pad_gate_cols(wih_t, h_dim, hp).astype(jnp.bfloat16)   # (E, 4Hp)
    whh_cols = _pad_gate_cols(whh_t, h_dim, hp)                     # (H, 4Hp)
    whh_p = jnp.zeros((hp, 4 * hp), jnp.float32).at[:h_dim, :].set(whh_cols)
    bias_p = _pad_gate_cols(bias, h_dim, hp).astype(jnp.float32)    # (1, 4Hp)

    needed = _tile_vmem_bytes(tile_b, T, e_dim, hp)
    vmem_limit = int(min(max(2 * needed, 16 << 20), 48 << 20))

    grid_spec = pltpu.PrefetchScalarGridSpec(
        num_scalar_prefetch=1,
        grid=(num_tiles,),
        in_specs=[
            pl.BlockSpec((T * tile_b, e_dim), lambda i, ml: (i, 0)),   # x2d
            pl.BlockSpec((tile_b, 1), lambda i, ml: (i, 0)),           # lengths
            pl.BlockSpec((e_dim, 4 * hp), lambda i, ml: (0, 0)),       # W_ih^T
            pl.BlockSpec((hp, 4 * hp), lambda i, ml: (0, 0)),          # W_hh^T
            pl.BlockSpec((1, 4 * hp), lambda i, ml: (0, 0)),           # bias
        ],
        out_specs=pl.BlockSpec((tile_b, hp), lambda i, ml: (i, 0)),
        scratch_shapes=[
            pltpu.VMEM((T * tile_b, 4 * hp), jnp.float32),  # gx (hoisted proj)
            pltpu.VMEM((tile_b, hp), jnp.float32),          # h
            pltpu.VMEM((tile_b, hp), jnp.float32),          # c
        ],
    )

    y = pl.pallas_call(
        lstm_last_kernel,
        out_shape=jax.ShapeDtypeStruct((bm_pad, hp), jnp.float32),
        grid_spec=grid_spec,
        compiler_params=pltpu.CompilerParams(
            dimension_semantics=("parallel",),   # shards batch tiles across TCs (v7x)
            vmem_limit_bytes=vmem_limit,
        ),
    )(maxlen, x2d, lens_col, wih_p, whh_p, bias_p)

    return y[:big_m, :h_dim].reshape(m, v_size, h_dim)


def embednet2d_reference(X_ids, X_num_2d_tokens, params):
    """Pure-JAX reference matching PyTorch LSTM + pack_padded semantics.
    Uses the same precision recipe as the kernel (bf16 input projection,
    f32 recurrence) so the comparison is apples-to-apples."""
    E_table = params["E"]
    wih_t = params["wih_t"]
    whh_t = params["whh_t"]
    bias = params["bias"]

    m, v_size, T = X_ids.shape
    big_m = m * v_size
    h_dim = whh_t.shape[0]

    ids_flat = X_ids.reshape(big_m, T)
    lengths = jnp.clip(X_num_2d_tokens.reshape(big_m).astype(jnp.int32), 1, T)
    x = jnp.take(E_table, ids_flat, axis=0)            # (big_m, T, E)
    x_bf = x.astype(jnp.bfloat16)
    wih_bf = wih_t.astype(jnp.bfloat16)

    h = jnp.zeros((big_m, h_dim), jnp.float32)
    c = jnp.zeros((big_m, h_dim), jnp.float32)
    out = jnp.zeros((big_m, h_dim), jnp.float32)
    for t in range(T):
        gx = jnp.dot(x_bf[:, t, :], wih_bf, preferred_element_type=jnp.float32)
        gates = gx + h @ whh_t + bias
        i_g = jax.nn.sigmoid(gates[:, 0 * h_dim:1 * h_dim])
        f_g = jax.nn.sigmoid(gates[:, 1 * h_dim:2 * h_dim])
        g_g = jnp.tanh(gates[:, 2 * h_dim:3 * h_dim])
        o_g = jax.nn.sigmoid(gates[:, 3 * h_dim:4 * h_dim])
        c = f_g * c + i_g * g_g
        h = o_g * jnp.tanh(c)
        out = jnp.where((t < lengths)[:, None], h, out)
    return out.reshape(m, v_size, h_dim)


def init_params(key, vocab_size, e_dim, h_dim):
    k_e, k_wih, k_whh, k_bih, k_bhh = jax.random.split(key, 5)
    # nn.Embedding: N(0, 1); nn.LSTM: U(-1/sqrt(H), 1/sqrt(H)); gate order [i,f,g,o].
    E_table = jax.random.normal(k_e, (vocab_size, e_dim), jnp.float32)
    bound = 1.0 / np.sqrt(h_dim)
    w_ih = jax.random.uniform(k_wih, (4 * h_dim, e_dim), jnp.float32, -bound, bound)
    w_hh = jax.random.uniform(k_whh, (4 * h_dim, h_dim), jnp.float32, -bound, bound)
    b_ih = jax.random.uniform(k_bih, (4 * h_dim,), jnp.float32, -bound, bound)
    b_hh = jax.random.uniform(k_bhh, (4 * h_dim,), jnp.float32, -bound, bound)
    return {
        "E": E_table,
        "wih_t": w_ih.T,                       # (E, 4H)
        "whh_t": w_hh.T,                       # (H, 4H)
        "bias": (b_ih + b_hh)[None, :],        # (1, 4H)
    }


if __name__ == "__main__":
    # Small shapes consistent with the module's forward:
    #   m=2 examples, V_size (max_num_1d_tokens)=4, T (max_num_2d_tokens)=8,
    #   vocab=10 chars, embedding_dim=16, h_dim=32.
    m, v_size, T = 2, 4, 8
    vocab_size, e_dim, h_dim = 10, 16, 32

    key = jax.random.PRNGKey(0)
    k_params, k_ids, k_len = jax.random.split(key, 3)

    params = init_params(k_params, vocab_size, e_dim, h_dim)
    X_ids = jax.random.randint(k_ids, (m, v_size, T), 0, vocab_size, jnp.int32)
    # lengths in [1, T] (pack_padded_sequence requires >= 1)
    X_num_2d_tokens = jax.random.randint(k_len, (m, v_size), 1, T + 1, jnp.int32)

    fwd = jax.jit(embednet2d_forward)
    y = fwd(X_ids, X_num_2d_tokens, params)
    y = jax.block_until_ready(y)

    y_ref = embednet2d_reference(X_ids, X_num_2d_tokens, params)
    np.testing.assert_allclose(np.asarray(y), np.asarray(y_ref),
                               rtol=2e-3, atol=2e-3)
    assert y.shape == (m, v_size, h_dim)

    print("KERNEL_OK")
</pallas_src>

<mosaic_0001>
module attributes {stable_mosaic.version = 11 : i64} {
  func.func @lstm_last_kernel(%arg0: i32, %arg1: memref<1xi32, #tpu.memory_space<smem>>, %arg2: memref<128x16xbf16, #tpu.memory_space<vmem>>, %arg3: memref<16x1xi32, #tpu.memory_space<vmem>>, %arg4: memref<16x512xbf16, #tpu.memory_space<vmem>>, %arg5: memref<128x512xf32, #tpu.memory_space<vmem>>, %arg6: memref<1x512xf32, #tpu.memory_space<vmem>>, %arg7: memref<16x128xf32, #tpu.memory_space<vmem>>, %arg8: memref<128x512xf32, #tpu.memory_space<vmem>>, %arg9: memref<16x128xf32, #tpu.memory_space<vmem>>, %arg10: memref<16x128xf32, #tpu.memory_space<vmem>>) attributes {dimension_semantics = [#tpu.dimension_semantics<parallel>], iteration_bounds = array<i64: 1>, scalar_prefetch = 1 : i64, scratch_operands = 3 : i64, tpu.core_type = #tpu.core_type<tc>, window_params = [{transform_indices = @transform_0, window_bounds = array<i64: 128, 16>}, {transform_indices = @transform_1, window_bounds = array<i64: 16, 1>}, {pipeline_mode = #tpu.pipeline_mode<synchronous>, transform_indices = @transform_2, window_bounds = array<i64: 16, 512>}, {pipeline_mode = #tpu.pipeline_mode<synchronous>, transform_indices = @transform_3, window_bounds = array<i64: 128, 512>}, {pipeline_mode = #tpu.pipeline_mode<synchronous>, transform_indices = @transform_4, window_bounds = array<i64: 1, 512>}, {transform_indices = @transform_5, window_bounds = array<i64: 16, 128>}]} {
    %c0 = arith.constant 0 : index
    %c0_0 = arith.constant 0 : index
    %0 = vector.load %arg2[%c0, %c0_0] : memref<128x16xbf16, #tpu.memory_space<vmem>>, vector<128x16xbf16>
    %c0_1 = arith.constant 0 : index
    %c0_2 = arith.constant 0 : index
    %1 = vector.load %arg4[%c0_1, %c0_2] : memref<16x512xbf16, #tpu.memory_space<vmem>>, vector<16x512xbf16>
    %cst = arith.constant dense<0.000000e+00> : vector<128x512xf32>
    %2 = tpu.matmul %0, %1, %cst {dimension_numbers = #tpu.dot_dimension_numbers<[1], [0], [0], [1], [0, 0, 1, 1], [], []>} : vector<128x16xbf16>, vector<16x512xbf16>, vector<128x512xf32> -> vector<128x512xf32>
    %c0_3 = arith.constant 0 : index
    %c0_4 = arith.constant 0 : index
    %3 = vector.load %arg6[%c0_3, %c0_4] : memref<1x512xf32, #tpu.memory_space<vmem>>, vector<1x512xf32>
    %4 = vector.broadcast %3 : vector<1x512xf32> to vector<128x512xf32>
    %5 = arith.addf %2, %4 : vector<128x512xf32>
    %c0_5 = arith.constant 0 : index
    %c0_6 = arith.constant 0 : index
    %6 = vector.load %arg8[%c0_5, %c0_6] : memref<128x512xf32, #tpu.memory_space<vmem>>, vector<128x512xf32>
    tpu.vector_store %arg8[%c0_5, %c0_6], %5 {strides = array<i32>} : memref<128x512xf32, #tpu.memory_space<vmem>>, vector<128x512xf32>,
    %cst_7 = arith.constant 0.000000e+00 : f32
    %7 = vector.broadcast %cst_7 : f32 to vector<16x128xf32>
    %c0_8 = arith.constant 0 : index
    %c0_9 = arith.constant 0 : index
    %8 = vector.load %arg9[%c0_8, %c0_9] : memref<16x128xf32, #tpu.memory_space<vmem>>, vector<16x128xf32>
    tpu.vector_store %arg9[%c0_8, %c0_9], %7 {strides = array<i32>} : memref<16x128xf32, #tpu.memory_space<vmem>>, vector<16x128xf32>,
    %cst_10 = arith.constant 0.000000e+00 : f32
    %9 = vector.broadcast %cst_10 : f32 to vector<16x128xf32>
    %c0_11 = arith.constant 0 : index
    %c0_12 = arith.constant 0 : index
    %10 = vector.load %arg10[%c0_11, %c0_12] : memref<16x128xf32, #tpu.memory_space<vmem>>, vector<16x128xf32>
    tpu.vector_store %arg10[%c0_11, %c0_12], %9 {strides = array<i32>} : memref<16x128xf32, #tpu.memory_space<vmem>>, vector<16x128xf32>,
    %c0_13 = arith.constant 0 : index
    %c0_14 = arith.constant 0 : index
    %11 = vector.load %arg3[%c0_13, %c0_14] : memref<16x1xi32, #tpu.memory_space<vmem>>, vector<16x1xi32>
    %12 = arith.index_cast %arg0 : i32 to index
    %13 = memref.load %arg1[%12] : memref<1xi32, #tpu.memory_space<smem>>
    %c0_i32 = arith.constant 0 : i32
    %c0_i32_15 = arith.constant 0 : i32
    %14 = arith.subi %13, %c0_i32_15 : i32
    %15 = arith.addi %c0_i32_15, %14 : i32
    %c1_i32 = arith.constant 1 : i32
    scf.for %arg11 = %c0_i32_15 to %15 step %c1_i32  : i32 {
      %c16_i32 = arith.constant 16 : i32
      %18 = arith.muli %arg11, %c16_i32 : i32
      %19 = tpu.assume_multiple %18, 16 : i32
      %20 = arith.index_cast %19 : i32 to index
      %c0_20 = arith.constant 0 : index
      %21 = vector.load %arg8[%20, %c0_20] : memref<128x512xf32, #tpu.memory_space<vmem>>, vector<16x512xf32>
      %c0_21 = arith.constant 0 : index
      %c0_22 = arith.constant 0 : index
      %22 = vector.load %arg9[%c0_21, %c0_22] : memref<16x128xf32, #tpu.memory_space<vmem>>, vector<16x128xf32>
      %c0_23 = arith.constant 0 : index
      %c0_24 = arith.constant 0 : index
      %23 = vector.load %arg5[%c0_23, %c0_24] : memref<128x512xf32, #tpu.memory_space<vmem>>, vector<128x512xf32>
      %cst_25 = arith.constant dense<0.000000e+00> : vector<16x512xf32>
      %24 = tpu.matmul %22, %23, %cst_25 {dimension_numbers = #tpu.dot_dimension_numbers<[1], [0], [0], [1], [0, 0, 1, 1], [], []>} : vector<16x128xf32>, vector<128x512xf32>, vector<16x512xf32> -> vector<16x512xf32>
      %25 = arith.addf %21, %24 : vector<16x512xf32>
      %26 = vector.extract_strided_slice %25 {offsets = [0, 0], sizes = [16, 128], strides = [1, 1]} : vector<16x512xf32> to vector<16x128xf32>
      %27 = arith.negf %26 : vector<16x128xf32>
      %28 = math.exp %27 : vector<16x128xf32>
      %cst_26 = arith.constant 1.000000e+00 : f32
      %29 = vector.broadcast %cst_26 : f32 to vector<16x128xf32>
      %30 = arith.addf %29, %28 : vector<16x128xf32>
      %31 = arith.divf %29, %30 : vector<16x128xf32>
      %32 = vector.extract_strided_slice %25 {offsets = [0, 128], sizes = [16, 128], strides = [1, 1]} : vector<16x512xf32> to vector<16x128xf32>
      %33 = arith.negf %32 : vector<16x128xf32>
      %34 = math.exp %33 : vector<16x128xf32>
      %cst_27 = arith.constant 1.000000e+00 : f32
      %35 = vector.broadcast %cst_27 : f32 to vector<16x128xf32>
      %36 = arith.addf %35, %34 : vector<16x128xf32>
      %37 = arith.divf %35, %36 : vector<16x128xf32>
      %38 = vector.extract_strided_slice %25 {offsets = [0, 256], sizes = [16, 128], strides = [1, 1]} : vector<16x512xf32> to vector<16x128xf32>
      %39 = math.tanh %38 : vector<16x128xf32>
      %40 = vector.extract_strided_slice %25 {offsets = [0, 384], sizes = [16, 128], strides = [1, 1]} : vector<16x512xf32> to vector<16x128xf32>
      %41 = arith.negf %40 : vector<16x128xf32>
      %42 = math.exp %41 : vector<16x128xf32>
      %cst_28 = arith.constant 1.000000e+00 : f32
      %43 = vector.broadcast %cst_28 : f32 to vector<16x128xf32>
      %44 = arith.addf %43, %42 : vector<16x128xf32>
      %45 = arith.divf %43, %44 : vector<16x128xf32>
      %c0_29 = arith.constant 0 : index
      %c0_30 = arith.constant 0 : index
      %46 = vector.load %arg10[%c0_29, %c0_30] : memref<16x128xf32, #tpu.memory_space<vmem>>, vector<16x128xf32>
      %47 = arith.mulf %37, %46 : vector<16x128xf32>
      %48 = arith.mulf %31, %39 : vector<16x128xf32>
      %49 = arith.addf %47, %48 : vector<16x128xf32>
      %50 = math.tanh %49 : vector<16x128xf32>
      %51 = arith.mulf %45, %50 : vector<16x128xf32>
      %52 = vector.broadcast %arg11 : i32 to vector<16x1xi32>
      %53 = arith.cmpi slt, %52, %11 : vector<16x1xi32>
      %c0_31 = arith.constant 0 : index
      %c0_32 = arith.constant 0 : index
      %54 = vector.load %arg10[%c0_31, %c0_32] : memref<16x128xf32, #tpu.memory_space<vmem>>, vector<16x128xf32>
      %55 = vector.shape_cast %53 : vector<16x1xi1> to vector<16x1xi1>
      %56 = vector.broadcast %55 : vector<16x1xi1> to vector<16x128xi1>
      %57 = arith.select %56, %49, %54 : vector<16x128xi1>, vector<16x128xf32>
      %c0_33 = arith.constant 0 : index
      %c0_34 = arith.constant 0 : index
      %58 = vector.load %arg10[%c0_33, %c0_34] : memref<16x128xf32, #tpu.memory_space<vmem>>, vector<16x128xf32>
      tpu.vector_store %arg10[%c0_33, %c0_34], %57 {strides = array<i32>} : memref<16x128xf32, #tpu.memory_space<vmem>>, vector<16x128xf32>,
      %c0_35 = arith.constant 0 : index
      %c0_36 = arith.constant 0 : index
      %59 = vector.load %arg9[%c0_35, %c0_36] : memref<16x128xf32, #tpu.memory_space<vmem>>, vector<16x128xf32>
      %60 = vector.shape_cast %53 : vector<16x1xi1> to vector<16x1xi1>
      %61 = vector.broadcast %60 : vector<16x1xi1> to vector<16x128xi1>
      %62 = arith.select %61, %51, %59 : vector<16x128xi1>, vector<16x128xf32>
      %c0_37 = arith.constant 0 : index
      %c0_38 = arith.constant 0 : index
      %63 = vector.load %arg9[%c0_37, %c0_38] : memref<16x128xf32, #tpu.memory_space<vmem>>, vector<16x128xf32>
      tpu.vector_store %arg9[%c0_37, %c0_38], %62 {strides = array<i32>} : memref<16x128xf32, #tpu.memory_space<vmem>>, vector<16x128xf32>,
    }
    %c0_16 = arith.constant 0 : index
    %c0_17 = arith.constant 0 : index
    %16 = vector.load %arg9[%c0_16, %c0_17] : memref<16x128xf32, #tpu.memory_space<vmem>>, vector<16x128xf32>
    %c0_18 = arith.constant 0 : index
    %c0_19 = arith.constant 0 : index
    %17 = vector.load %arg7[%c0_18, %c0_19] : memref<16x128xf32, #tpu.memory_space<vmem>>, vector<16x128xf32>
    tpu.vector_store %arg7[%c0_18, %c0_19], %16 {strides = array<i32>} : memref<16x128xf32, #tpu.memory_space<vmem>>, vector<16x128xf32>,
    return
  }
  func.func @transform_0(%arg0: i32, %arg1: memref<1xi32, #tpu.memory_space<smem>>) -> (i32, i32) {
    %c0_i32 = arith.constant 0 : i32
    %c0_i32_0 = arith.constant 0 : i32
    return %arg0, %c0_i32 : i32, i32
  }
  func.func @transform_1(%arg0: i32, %arg1: memref<1xi32, #tpu.memory_space<smem>>) -> (i32, i32) {
    %c0_i32 = arith.constant 0 : i32
    %c0_i32_0 = arith.constant 0 : i32
    return %arg0, %c0_i32 : i32, i32
  }
  func.func @transform_2(%arg0: i32, %arg1: memref<1xi32, #tpu.memory_space<smem>>) -> (i32, i32) {
    %c0_i32 = arith.constant 0 : i32
    %c0_i32_0 = arith.constant 0 : i32
    %c0_i32_1 = arith.constant 0 : i32
    return %c0_i32, %c0_i32_0 : i32, i32
  }
  func.func @transform_3(%arg0: i32, %arg1: memref<1xi32, #tpu.memory_space<smem>>) -> (i32, i32) {
    %c0_i32 = arith.constant 0 : i32
    %c0_i32_0 = arith.constant 0 : i32
    %c0_i32_1 = arith.constant 0 : i32
    return %c0_i32, %c0_i32_0 : i32, i32
  }
  func.func @transform_4(%arg0: i32, %arg1: memref<1xi32, #tpu.memory_space<smem>>) -> (i32, i32) {
    %c0_i32 = arith.constant 0 : i32
    %c0_i32_0 = arith.constant 0 : i32
    %c0_i32_1 = arith.constant 0 : i32
    return %c0_i32, %c0_i32_0 : i32, i32
  }
  func.func @transform_5(%arg0: i32, %arg1: memref<1xi32, #tpu.memory_space<smem>>) -> (i32, i32) {
    %c0_i32 = arith.constant 0 : i32
    %c0_i32_0 = arith.constant 0 : i32
    return %arg0, %c0_i32 : i32, i32
  }
}

</mosaic_0001>

<llo_original>
// kernel: embednet2d_forward.1
$region0: #{embednet2d_forward.1}
  #allocation0 [shape = 'u32[]', space=smem, size = 0x4, offset = 0x4, fixed_abs, tag = 'smem constant byte address 0x4 - core index']
  #allocation1 [shape = 'u32[144,128]{1,0:T(1,128)}', space=vmem, size = 0x12000, scoped, tag = 'internal scratch']
  #allocation2 [shape = 'f32[128,512]{1,0:T(8,128)}', space=vmem, size = 0x40000, scoped, tag = 'scratch operand']
  #allocation3 [shape = 'f32[16,128]{1,0:T(8,128)}', space=vmem, size = 0x2000, scoped, tag = 'scratch operand']
  #allocation4 [shape = 'f32[16,128]{1,0:T(8,128)}', space=vmem, size = 0x2000, scoped, tag = 'scratch operand']
  #allocation5 [shape = 's32[1]{0}', space=sflag, size = 0x4, scoped, tag = 'scoped memory for embednet2d_forward.1']
  #allocation6 [shape = 's32[1]{0:T(128)S(6)}', space=smem, size = 0x200, scoped, tag = 'prefetched SMEM operand 0']
  %s0 = inlined_call_operand.<no memory space> [shape: s32[1], index: 0, kind: input, shape index: {}]
  %s1 = inlined_call_operand.vmem [shape: bf16[128,16], index: 1, kind: input, shape index: {}]
  %s2 = inlined_call_operand.vmem [shape: s32[16,1], index: 2, kind: input, shape index: {}]
  %s3 = inlined_call_operand.vmem [shape: bf16[16,512], index: 3, kind: input, shape index: {}]
  %s4 = inlined_call_operand.vmem [shape: f32[128,512], index: 4, kind: input, shape index: {}]
  %s5 = inlined_call_operand.vmem [shape: f32[1,512], index: 5, kind: input, shape index: {}]
  %s6 = inlined_call_operand.vmem [shape: f32[16,128], index: 6, kind: output, shape index: {}]
  %s7 = sld [smem:[#allocation0]]
  $region37: #{embednet2d_forward.1} parent=0
    _
  %s9 = ssub.s32 1, %s7
  %s10 = scalar_select 0, %s9, %s7
  %11 = sst [smem:[#allocation6]] %s0
  // Predicated region
  $region2: #{embednet2d_forward.1} parent=0 // pred_check
    _
  $region3: #{embednet2d_forward.1} parent=0 // pred_check_branch
    %13 = sbr.rel (0) target = $region5
  $region4: #{embednet2d_forward.1} parent=0 // pred_region
    _
  $region5: #{embednet2d_forward.1} parent=0 // pred_fallthru
    _
  // Predicated region
  $region6: #{embednet2d_forward.1} parent=0 // pred_check
    _
  $region7: #{embednet2d_forward.1} parent=0 // pred_check_branch
    %15 = sbr.rel (0) target = $region9
  $region8: #{embednet2d_forward.1} parent=0 // pred_region
    _
  $region9: #{embednet2d_forward.1} parent=0 // pred_fallthru
    _
  // Predicated region
  $region10: #{embednet2d_forward.1} parent=0 // pred_check
    _
  $region11: #{embednet2d_forward.1} parent=0 // pred_check_branch
    %17 = sbr.rel (0) target = $region13
  $region12: #{embednet2d_forward.1} parent=0 // pred_region
    _
  $region13: #{embednet2d_forward.1} parent=0 // pred_fallthru
    _
  // Predicated region
  $region14: #{embednet2d_forward.1} parent=0 // pred_check
    _
  $region15: #{embednet2d_forward.1} parent=0 // pred_check_branch
    %19 = sbr.rel (0) target = $region17
  $region16: #{embednet2d_forward.1} parent=0 // pred_region
    _
  $region17: #{embednet2d_forward.1} parent=0 // pred_fallthru
    _
  // Predicated region
  $region18: #{embednet2d_forward.1} parent=0 // pred_check
    _
  $region19: #{embednet2d_forward.1} parent=0 // pred_check_branch
    %21 = sbr.rel (0) target = $region21
  $region20: #{embednet2d_forward.1} parent=0 // pred_region
    _
  $region21: #{embednet2d_forward.1} parent=0 // pred_fallthru
    _
  %v23 = vld [vmem:[%s1] sm:$0xf]
  %v24 = vld [vmem:[%s1 + $0x4] sm:$0xf]
  %v25 = vld [vmem:[%s1 + $0x8] sm:$0xf]
  %v26 = vld [vmem:[%s1 + $0xc] sm:$0xf]
  %v27 = vld [vmem:[%s1 + $0x10] sm:$0xf]
  %v28 = vld [vmem:[%s1 + $0x14] sm:$0xf]
  %v29 = vld [vmem:[%s1 + $0x18] sm:$0xf]
  %v30 = vld [vmem:[%s1 + $0x1c] sm:$0xf]
  %v31 = vld [vmem:[%s1 + $0x20] sm:$0xf]
  %v32 = vld [vmem:[%s1 + $0x24] sm:$0xf]
  %v33 = vld [vmem:[%s1 + $0x28] sm:$0xf]
  %v34 = vld [vmem:[%s1 + $0x2c] sm:$0xf]
  %v35 = vld [vmem:[%s1 + $0x30] sm:$0xf]
  %v36 = vld [vmem:[%s1 + $0x34] sm:$0xf]
  %v37 = vld [vmem:[%s1 + $0x38] sm:$0xf]
  %v38 = vld [vmem:[%s1 + $0x3c] sm:$0xf]
  %v39 = vld [vmem:[%s3] sm:$0xff]
  %v40 = vld [vmem:[%s3 + $0x8] sm:$0xff]
  %v41 = vld [vmem:[%s3 + $0x10] sm:$0xff]
  %v42 = vld [vmem:[%s3 + $0x18] sm:$0xff]
  %v43 = vld [vmem:[%s5] sm:$0xf]
  %v45 = vlaneseq
  %v46 = vshrl.u32 %v45, 7
  %v47 = vsub.s32 0, %v46
  %v48 = vrot.slane %v43, %v47
  %v49 = vlaneseq
  %v50 = vshrl.u32 %v49, 7
  %v51 = vsub.s32 1, %v50
  %v52 = vrot.slane %v43, %v51
  %v53 = vlaneseq
  %v54 = vshrl.u32 %v53, 7
  %v55 = vsub.s32 2, %v54
  %v56 = vrot.slane %v43, %v55
  %v57 = vlaneseq
  %v58 = vshrl.u32 %v57, 7
  %v59 = vsub.s32 3, %v58
  %v60 = vrot.slane %v43, %v59
  %v81 = vunpack.c.l.b16 %v23
  %v82 = vunpack.c.l.b16 %v24
  %v83 = vunpack.c.l.b16 %v25
  %v84 = vunpack.c.l.b16 %v26
  %v85 = vunpack.c.l.b16 %v27
  %v86 = vunpack.c.l.b16 %v28
  %v87 = vunpack.c.l.b16 %v29
  %v88 = vunpack.c.l.b16 %v30
  %v89 = vunpack.c.l.b16 %v31
  %v90 = vunpack.c.l.b16 %v32
  %v91 = vunpack.c.l.b16 %v33
  %v92 = vunpack.c.l.b16 %v34
  %v93 = vunpack.c.l.b16 %v35
  %v94 = vunpack.c.l.b16 %v36
  %v95 = vunpack.c.l.b16 %v37
  %v96 = vunpack.c.l.b16 %v38
  %v97 = vpack.c.b16 %v82, %v81
  %v98 = vpack.c.b16 %v84, %v83
  %v99 = vpack.c.b16 %v86, %v85
  %v100 = vpack.c.b16 %v88, %v87
  %v101 = vpack.c.b16 %v90, %v89
  %v102 = vpack.c.b16 %v92, %v91
  %v103 = vpack.c.b16 %v94, %v93
  %v104 = vpack.c.b16 %v96, %v95
  %v109 = vunpack.c.l.b16 %v39
  %v110 = vunpack.c.h.b16 %v39
  %v111 = vunpack.c.l.b16 %v40
  %v112 = vunpack.c.h.b16 %v40
  %v113 = vunpack.c.l.b16 %v41
  %v114 = vunpack.c.h.b16 %v41
  %v115 = vunpack.c.l.b16 %v42
  %v116 = vunpack.c.h.b16 %v42
  %v117 = vpack.c.b16 %v113, %v109
  %v118 = vpack.c.b16 %v114, %v110
  %v119 = vpack.c.b16 %v115, %v111
  %v120 = vpack.c.b16 %v116, %v112
  %vm125 = vcmask 130048
  %v127 = vsel %vm125, %v97, 0
  %v130 = vsel %vm125, %v98, 0
  %v133 = vsel %vm125, %v99, 0
  %v136 = vsel %vm125, %v100, 0
  %v139 = vsel %vm125, %v101, 0
  %v142 = vsel %vm125, %v102, 0
  %v145 = vsel %vm125, %v103, 0
  %v148 = vsel %vm125, %v104, 0
  %150 = vmatprep.subr.bf16.mxu0 %v118
  %151 = vmatpush1.bf16.msra.mxu0 %v117
  %152 = vmatprep.subr.bf16.mxu0 0
  %153 = vmatpush1.bf16.msra.mxu0 0
  %154 = vmatprep.subr.bf16.mxu0 0
  %155 = vmatpush1.bf16.msra.mxu0 0
  %156 = vmatprep.subr.bf16.mxu0 0
  %157 = vmatpush1.bf16.msra.mxu0 0
  %158 = vmatprep.subr.bf16.mxu0 0
  %159 = vmatpush1.bf16.msra.mxu0 0
  %160 = vmatprep.subr.bf16.mxu0 0
  %161 = vmatpush1.bf16.msra.mxu0 0
  %162 = vmatprep.subr.bf16.mxu0 0
  %163 = vmatpush1.bf16.msra.mxu0 0
  %164 = vmatprep.subr.bf16.mxu0 0
  %165 = vmatpush1.bf16.msra.mxu0 0
  %166 = vmatprep.subr.bf16.mxu0 0
  %167 = vmatpush1.bf16.msra.mxu0 0
  %168 = vmatprep.subr.bf16.mxu0 0
  %169 = vmatpush1.bf16.msra.mxu0 0
  %170 = vmatprep.subr.bf16.mxu0 0
  %171 = vmatpush1.bf16.msra.mxu0 0
  %172 = vmatprep.subr.bf16.mxu0 0
  %173 = vmatpush1.bf16.msra.mxu0 0
  %174 = vmatprep.subr.bf16.mxu0 0
  %175 = vmatpush1.bf16.msra.mxu0 0
  %176 = vmatprep.subr.bf16.mxu0 0
  %177 = vmatpush1.bf16.msra.mxu0 0
  %178 = vmatprep.subr.bf16.mxu0 0
  %179 = vmatpush1.bf16.msra.mxu0 0
  %180 = vmatprep.subr.bf16.mxu0 0
  %181 = vmatpush1.bf16.msra.mxu0 0
  %182 = vmatprep.mubr.bf16.mxu0 0
  %183 = vmatmul.mubr.bf16.gmra.mrb[0].mxu0 %v127
  %v184 = vpop.f32.mrb[0].mxu0
  %v185 = vadd.f32 %v48, %v184
  %v186 = vpop.f32.mrb[0].mxu0
  %v187 = vadd.f32 %v52, %v186
  %v188 = vpop.f32.mrb[0].mxu0
  %v189 = vadd.f32 %v48, %v188
  %v190 = vpop.f32.mrb[0].mxu0
  %v191 = vadd.f32 %v52, %v190
  %192 = vmatprep.mubr.bf16.mxu0 0
  %193 = vmatmul.mubr.bf16.gmra.mrb[0].mxu0 %v130
  %v194 = vpop.f32.mrb[0].mxu0
  %v195 = vadd.f32 %v48, %v194
  %v196 = vpop.f32.mrb[0].mxu0
  %v197 = vadd.f32 %v52, %v196
  %v198 = vpop.f32.mrb[0].mxu0
  %v199 = vadd.f32 %v48, %v198
  %v200 = vpop.f32.mrb[0].mxu0
  %v201 = vadd.f32 %v52, %v200
  %202 = vmatprep.mubr.bf16.mxu0 0
  %203 = vmatmul.mubr.bf16.gmra.mrb[0].mxu0 %v133
  %v204 = vpop.f32.mrb[0].mxu0
  %v205 = vadd.f32 %v48, %v204
  %v206 = vpop.f32.mrb[0].mxu0
  %v207 = vadd.f32 %v52, %v206
  %v208 = vpop.f32.mrb[0].mxu0
  %v209 = vadd.f32 %v48, %v208
  %v210 = vpop.f32.mrb[0].mxu0
  %v211 = vadd.f32 %v52, %v210
  %212 = vmatprep.mubr.bf16.mxu0 0
  %213 = vmatmul.mubr.bf16.gmra.mrb[0].mxu0 %v136
  %v214 = vpop.f32.mrb[0].mxu0
  %v215 = vadd.f32 %v48, %v214
  %v216 = vpop.f32.mrb[0].mxu0
  %v217 = vadd.f32 %v52, %v216
  %v218 = vpop.f32.mrb[0].mxu0
  %v219 = vadd.f32 %v48, %v218
  %v220 = vpop.f32.mrb[0].mxu0
  %v221 = vadd.f32 %v52, %v220
  %222 = vmatprep.mubr.bf16.mxu0 0
  %223 = vmatmul.mubr.bf16.gmra.mrb[0].mxu0 %v139
  %v224 = vpop.f32.mrb[0].mxu0
  %v225 = vadd.f32 %v48, %v224
  %v226 = vpop.f32.mrb[0].mxu0
  %v227 = vadd.f32 %v52, %v226
  %v228 = vpop.f32.mrb[0].mxu0
  %v229 = vadd.f32 %v48, %v228
  %v230 = vpop.f32.mrb[0].mxu0
  %v231 = vadd.f32 %v52, %v230
  %232 = vmatprep.mubr.bf16.mxu0 0
  %233 = vmatmul.mubr.bf16.gmra.mrb[0].mxu0 %v142
  %v234 = vpop.f32.mrb[0].mxu0
  %v235 = vadd.f32 %v48, %v234
  %v236 = vpop.f32.mrb[0].mxu0
  %v237 = vadd.f32 %v52, %v236
  %v238 = vpop.f32.mrb[0].mxu0
  %v239 = vadd.f32 %v48, %v238
  %v240 = vpop.f32.mrb[0].mxu0
  %v241 = vadd.f32 %v52, %v240
  %242 = vmatprep.mubr.bf16.mxu0 0
  %243 = vmatmul.mubr.bf16.gmra.mrb[0].mxu0 %v145
  %v244 = vpop.f32.mrb[0].mxu0
  %v245 = vadd.f32 %v48, %v244
  %v246 = vpop.f32.mrb[0].mxu0
  %v247 = vadd.f32 %v52, %v246
  %v248 = vpop.f32.mrb[0].mxu0
  %v249 = vadd.f32 %v48, %v248
  %v250 = vpop.f32.mrb[0].mxu0
  %v251 = vadd.f32 %v52, %v250
  %252 = vmatprep.mubr.bf16.mxu0 0
  %253 = vmatmul.mubr.bf16.gmra.mrb[0].mxu0 %v148
  %v254 = vpop.f32.mrb[0].mxu0
  %v255 = vadd.f32 %v48, %v254
  %v256 = vpop.f32.mrb[0].mxu0
  %v257 = vadd.f32 %v52, %v256
  %v258 = vpop.f32.mrb[0].mxu0
  %v259 = vadd.f32 %v48, %v258
  %v260 = vpop.f32.mrb[0].mxu0
  %v261 = vadd.f32 %v52, %v260
  %262 = vdwg.mxu0
  %263 = vmatprep.subr.bf16.mxu0 %v120
  %264 = vmatpush1.bf16.msra.mxu0 %v119
  %265 = vmatprep.subr.bf16.mxu0 0
  %266 = vmatpush1.bf16.msra.mxu0 0
  %267 = vmatprep.subr.bf16.mxu0 0
  %268 = vmatpush1.bf16.msra.mxu0 0
  %269 = vmatprep.subr.bf16.mxu0 0
  %270 = vmatpush1.bf16.msra.mxu0 0
  %271 = vmatprep.subr.bf16.mxu0 0
  %272 = vmatpush1.bf16.msra.mxu0 0
  %273 = vmatprep.subr.bf16.mxu0 0
  %274 = vmatpush1.bf16.msra.mxu0 0
  %275 = vmatprep.subr.bf16.mxu0 0
  %276 = vmatpush1.bf16.msra.mxu0 0
  %277 = vmatprep.subr.bf16.mxu0 0
  %278 = vmatpush1.bf16.msra.mxu0 0
  %279 = vmatprep.subr.bf16.mxu0 0
  %280 = vmatpush1.bf16.msra.mxu0 0
  %281 = vmatprep.subr.bf16.mxu0 0
  %282 = vmatpush1.bf16.msra.mxu0 0
  %283 = vmatprep.subr.bf16.mxu0 0
  %284 = vmatpush1.bf16.msra.mxu0 0
  %285 = vmatprep.subr.bf16.mxu0 0
  %286 = vmatpush1.bf16.msra.mxu0 0
  %287 = vmatprep.subr.bf16.mxu0 0
  %288 = vmatpush1.bf16.msra.mxu0 0
  %289 = vmatprep.subr.bf16.mxu0 0
  %290 = vmatpush1.bf16.msra.mxu0 0
  %291 = vmatprep.subr.bf16.mxu0 0
  %292 = vmatpush1.bf16.msra.mxu0 0
  %293 = vmatprep.subr.bf16.mxu0 0
  %294 = vmatpush1.bf16.msra.mxu0 0
  %295 = vmatprep.mubr.bf16.mxu0 0
  %296 = vmatmul.mubr.bf16.gmra.mrb[0].mxu0 %v127
  %v297 = vpop.f32.mrb[0].mxu0
  %v298 = vadd.f32 %v56, %v297
  %v299 = vpop.f32.mrb[0].mxu0
  %v300 = vadd.f32 %v60, %v299
  %v301 = vpop.f32.mrb[0].mxu0
  %v302 = vadd.f32 %v56, %v301
  %v303 = vpop.f32.mrb[0].mxu0
  %v304 = vadd.f32 %v60, %v303
  %305 = vmatprep.mubr.bf16.mxu0 0
  %306 = vmatmul.mubr.bf16.gmra.mrb[0].mxu0 %v130
  %v307 = vpop.f32.mrb[0].mxu0
  %v308 = vadd.f32 %v56, %v307
  %v309 = vpop.f32.mrb[0].mxu0
  %v310 = vadd.f32 %v60, %v309
  %v311 = vpop.f32.mrb[0].mxu0
  %v312 = vadd.f32 %v56, %v311
  %v313 = vpop.f32.mrb[0].mxu0
  %v314 = vadd.f32 %v60, %v313
  %315 = vmatprep.mubr.bf16.mxu0 0
  %316 = vmatmul.mubr.bf16.gmra.mrb[0].mxu0 %v133
  %v317 = vpop.f32.mrb[0].mxu0
  %v318 = vadd.f32 %v56, %v317
  %v319 = vpop.f32.mrb[0].mxu0
  %v320 = vadd.f32 %v60, %v319
  %v321 = vpop.f32.mrb[0].mxu0
  %v322 = vadd.f32 %v56, %v321
  %v323 = vpop.f32.mrb[0].mxu0
  %v324 = vadd.f32 %v60, %v323
  %325 = vmatprep.mubr.bf16.mxu0 0
  %326 = vmatmul.mubr.bf16.gmra.mrb[0].mxu0 %v136
  %v327 = vpop.f32.mrb[0].mxu0
  %v328 = vadd.f32 %v56, %v327
  %v329 = vpop.f32.mrb[0].mxu0
  %v330 = vadd.f32 %v60, %v329
  %v331 = vpop.f32.mrb[0].mxu0
  %v332 = vadd.f32 %v56, %v331
  %v333 = vpop.f32.mrb[0].mxu0
  %v334 = vadd.f32 %v60, %v333
  %335 = vmatprep.mubr.bf16.mxu0 0
  %336 = vmatmul.mubr.bf16.gmra.mrb[0].mxu0 %v139
  %v337 = vpop.f32.mrb[0].mxu0
  %v338 = vadd.f32 %v56, %v337
  %v339 = vpop.f32.mrb[0].mxu0
  %v340 = vadd.f32 %v60, %v339
  %v341 = vpop.f32.mrb[0].mxu0
  %v342 = vadd.f32 %v56, %v341
  %v343 = vpop.f32.mrb[0].mxu0
  %v344 = vadd.f32 %v60, %v343
  %345 = vmatprep.mubr.bf16.mxu0 0
  %346 = vmatmul.mubr.bf16.gmra.mrb[0].mxu0 %v142
  %v347 = vpop.f32.mrb[0].mxu0
  %v348 = vadd.f32 %v56, %v347
  %v349 = vpop.f32.mrb[0].mxu0
  %v350 = vadd.f32 %v60, %v349
  %v351 = vpop.f32.mrb[0].mxu0
  %v352 = vadd.f32 %v56, %v351
  %v353 = vpop.f32.mrb[0].mxu0
  %v354 = vadd.f32 %v60, %v353
  %355 = vmatprep.mubr.bf16.mxu0 0
  %356 = vmatmul.mubr.bf16.gmra.mrb[0].mxu0 %v145
  %v357 = vpop.f32.mrb[0].mxu0
  %v358 = vadd.f32 %v56, %v357
  %v359 = vpop.f32.mrb[0].mxu0
  %v360 = vadd.f32 %v60, %v359
  %v361 = vpop.f32.mrb[0].mxu0
  %v362 = vadd.f32 %v56, %v361
  %v363 = vpop.f32.mrb[0].mxu0
  %v364 = vadd.f32 %v60, %v363
  %365 = vmatprep.mubr.bf16.mxu0 0
  %366 = vmatmul.mubr.bf16.gmra.mrb[0].mxu0 %v148
  %v367 = vpop.f32.mrb[0].mxu0
  %v368 = vadd.f32 %v56, %v367
  %v369 = vpop.f32.mrb[0].mxu0
  %v370 = vadd.f32 %v60, %v369
  %v371 = vpop.f32.mrb[0].mxu0
  %v372 = vadd.f32 %v56, %v371
  %v373 = vpop.f32.mrb[0].mxu0
  %v374 = vadd.f32 %v60, %v373
  %375 = vdwg.mxu0
  %376 = vst [vmem:[#allocation2] sm:$0xff] %v185
  %377 = vst [vmem:[#allocation2 + $0x8] sm:$0xff] %v187
  %378 = vst [vmem:[#allocation2 + $0x10] sm:$0xff] %v298
  %379 = vst [vmem:[#allocation2 + $0x18] sm:$0xff] %v300
  %380 = vst [vmem:[#allocation2 + $0x20] sm:$0xff] %v189
  %381 = vst [vmem:[#allocation2 + $0x28] sm:$0xff] %v191
  %382 = vst [vmem:[#allocation2 + $0x30] sm:$0xff] %v302
  %383 = vst [vmem:[#allocation2 + $0x38] sm:$0xff] %v304
  %384 = vst [vmem:[#allocation2 + $0x40] sm:$0xff] %v195
  %385 = vst [vmem:[#allocation2 + $0x48] sm:$0xff] %v197
  %386 = vst [vmem:[#allocation2 + $0x50] sm:$0xff] %v308
  %387 = vst [vmem:[#allocation2 + $0x58] sm:$0xff] %v310
  %388 = vst [vmem:[#allocation2 + $0x60] sm:$0xff] %v199
  %389 = vst [vmem:[#allocation2 + $0x68] sm:$0xff] %v201
  %390 = vst [vmem:[#allocation2 + $0x70] sm:$0xff] %v312
  %391 = vst [vmem:[#allocation2 + $0x78] sm:$0xff] %v314
  %392 = vst [vmem:[#allocation2 + $0x80] sm:$0xff] %v205
  %393 = vst [vmem:[#allocation2 + $0x88] sm:$0xff] %v207
  %394 = vst [vmem:[#allocation2 + $0x90] sm:$0xff] %v318
  %395 = vst [vmem:[#allocation2 + $0x98] sm:$0xff] %v320
  %396 = vst [vmem:[#allocation2 + $0xa0] sm:$0xff] %v209
  %397 = vst [vmem:[#allocation2 + $0xa8] sm:$0xff] %v211
  %398 = vst [vmem:[#allocation2 + $0xb0] sm:$0xff] %v322
  %399 = vst [vmem:[#allocation2 + $0xb8] sm:$0xff] %v324
  %400 = vst [vmem:[#allocation2 + $0xc0] sm:$0xff] %v215
  %401 = vst [vmem:[#allocation2 + $0xc8] sm:$0xff] %v217
  %402 = vst [vmem:[#allocation2 + $0xd0] sm:$0xff] %v328
  %403 = vst [vmem:[#allocation2 + $0xd8] sm:$0xff] %v330
  %404 = vst [vmem:[#allocation2 + $0xe0] sm:$0xff] %v219
  %405 = vst [vmem:[#allocation2 + $0xe8] sm:$0xff] %v221
  %406 = vst [vmem:[#allocation2 + $0xf0] sm:$0xff] %v332
  %407 = vst [vmem:[#allocation2 + $0xf8] sm:$0xff] %v334
  %408 = vst [vmem:[#allocation2 + $0x100] sm:$0xff] %v225
  %409 = vst [vmem:[#allocation2 + $0x108] sm:$0xff] %v227
  %410 = vst [vmem:[#allocation2 + $0x110] sm:$0xff] %v338
  %411 = vst [vmem:[#allocation2 + $0x118] sm:$0xff] %v340
  %412 = vst [vmem:[#allocation2 + $0x120] sm:$0xff] %v229
  %413 = vst [vmem:[#allocation2 + $0x128] sm:$0xff] %v231
  %414 = vst [vmem:[#allocation2 + $0x130] sm:$0xff] %v342
  %415 = vst [vmem:[#allocation2 + $0x138] sm:$0xff] %v344
  %416 = vst [vmem:[#allocation2 + $0x140] sm:$0xff] %v235
  %417 = vst [vmem:[#allocation2 + $0x148] sm:$0xff] %v237
  %418 = vst [vmem:[#allocation2 + $0x150] sm:$0xff] %v348
  %419 = vst [vmem:[#allocation2 + $0x158] sm:$0xff] %v350
  %420 = vst [vmem:[#allocation2 + $0x160] sm:$0xff] %v239
  %421 = vst [vmem:[#allocation2 + $0x168] sm:$0xff] %v241
  %422 = vst [vmem:[#allocation2 + $0x170] sm:$0xff] %v352
  %423 = vst [vmem:[#allocation2 + $0x178] sm:$0xff] %v354
  %424 = vst [vmem:[#allocation2 + $0x180] sm:$0xff] %v245
  %425 = vst [vmem:[#allocation2 + $0x188] sm:$0xff] %v247
  %426 = vst [vmem:[#allocation2 + $0x190] sm:$0xff] %v358
  %427 = vst [vmem:[#allocation2 + $0x198] sm:$0xff] %v360
  %428 = vst [vmem:[#allocation2 + $0x1a0] sm:$0xff] %v249
  %429 = vst [vmem:[#allocation2 + $0x1a8] sm:$0xff] %v251
  %430 = vst [vmem:[#allocation2 + $0x1b0] sm:$0xff] %v362
  %431 = vst [vmem:[#allocation2 + $0x1b8] sm:$0xff] %v364
  %432 = vst [vmem:[#allocation2 + $0x1c0] sm:$0xff] %v255
  %433 = vst [vmem:[#allocation2 + $0x1c8] sm:$0xff] %v257
  %434 = vst [vmem:[#allocation2 + $0x1d0] sm:$0xff] %v368
  %435 = vst [vmem:[#allocation2 + $0x1d8] sm:$0xff] %v370
  %436 = vst [vmem:[#allocation2 + $0x1e0] sm:$0xff] %v259
  %437 = vst [vmem:[#allocation2 + $0x1e8] sm:$0xff] %v261
  %438 = vst [vmem:[#allocation2 + $0x1f0] sm:$0xff] %v372
  %439 = vst [vmem:[#allocation2 + $0x1f8] sm:$0xff] %v374
  %440 = vst [vmem:[#allocation3] sm:$0xff] 0.0
  %441 = vst [vmem:[#allocation3 + $0x8] sm:$0xff] 0.0
  %442 = vst [vmem:[#allocation4] sm:$0xff] 0.0
  %443 = vst [vmem:[#allocation4 + $0x8] sm:$0xff] 0.0
  %v444 = vld [vmem:[%s2] sm:$0xff]
  %v445 = vld [vmem:[%s2 + $0x8] sm:$0xff]
  %s446 = sld [smem:[#allocation6]]
  // While loop
  $region22: #{embednet2d_forward.1} parent=0 // loop_pre_header
    _
  $region23: #{embednet2d_forward.1} parent=0 // loop_header
    %s448 = sphi 0, %s450
    %p449 = scmp.ge.s32.totalorder %s448, %s446
  $region24: #{embednet2d_forward.1} parent=0 // loop_header_branch
    %452 = sbr.rel (%p449) target = $region28
  $region25: #{embednet2d_forward.1} parent=0 // loop_body
    %s453 = smul.u32 %s448, 16
    %s454 = sshra.s32 %s453, 3
    %s455 = sand.u32 %s453, 7
    %s456 = smul.u32 %s454, 4
    %s457 = smul.addr %s456, 8
    %s458 = scalar_lea.vmem [#allocation2], %s457
    %v459 = vld [vmem:[%s458] sm:$0xff]
    %v460 = vld [vmem:[%s458 + $0x8] sm:$0xff]
    %v461 = vld [vmem:[%s458 + $0x10] sm:$0xff]
    %v462 = vld [vmem:[%s458 + $0x18] sm:$0xff]
    %v463 = vld [vmem:[%s458 + $0x20] sm:$0xff]
    %v464 = vld [vmem:[%s458 + $0x28] sm:$0xff]
    %v465 = vld [vmem:[%s458 + $0x30] sm:$0xff]
    %v466 = vld [vmem:[%s458 + $0x38] sm:$0xff]
    %v467 = vld [vmem:[#allocation3] sm:$0xff]
    %v468 = vld [vmem:[#allocation3 + $0x8] sm:$0xff]
    %v469 = vld [vmem:[%s4] sm:$0xff]
    %v470 = vld [vmem:[%s4 + $0x8] sm:$0xff]
    %v471 = vld [vmem:[%s4 + $0x10] sm:$0xff]
    %v472 = vld [vmem:[%s4 + $0x18] sm:$0xff]
    %v473 = vld [vmem:[%s4 + $0x20] sm:$0xff]
    %v474 = vld [vmem:[%s4 + $0x28] sm:$0xff]
    %v475 = vld [vmem:[%s4 + $0x30] sm:$0xff]
    %v476 = vld [vmem:[%s4 + $0x38] sm:$0xff]
    %v477 = vld [vmem:[%s4 + $0x40] sm:$0xff]
    %v478 = vld [vmem:[%s4 + $0x48] sm:$0xff]
    %v479 = vld [vmem:[%s4 + $0x50] sm:$0xff]
    %v480 = vld [vmem:[%s4 + $0x58] sm:$0xff]
    %v481 = vld [vmem:[%s4 + $0x60] sm:$0xff]
    %v482 = vld [vmem:[%s4 + $0x68] sm:$0xff]
    %v483 = vld [vmem:[%s4 + $0x70] sm:$0xff]
    %v484 = vld [vmem:[%s4 + $0x78] sm:$0xff]
    %v485 = vld [vmem:[%s4 + $0x80] sm:$0xff]
    %v486 = vld [vmem:[%s4 + $0x88] sm:$0xff]
    %v487 = vld [vmem:[%s4 + $0x90] sm:$0xff]
    %v488 = vld [vmem:[%s4 + $0x98] sm:$0xff]
    %v489 = vld [vmem:[%s4 + $0xa0] sm:$0xff]
    %v490 = vld [vmem:[%s4 + $0xa8] sm:$0xff]
    %v491 = vld [vmem:[%s4 + $0xb0] sm:$0xff]
    %v492 = vld [vmem:[%s4 + $0xb8] sm:$0xff]
    %v493 = vld [vmem:[%s4 + $0xc0] sm:$0xff]
    %v494 = vld [vmem:[%s4 + $0xc8] sm:$0xff]
    %v495 = vld [vmem:[%s4 + $0xd0] sm:$0xff]
    %v496 = vld [vmem:[%s4 + $0xd8] sm:$0xff]
    %v497 = vld [vmem:[%s4 + $0xe0] sm:$0xff]
    %v498 = vld [vmem:[%s4 + $0xe8] sm:$0xff]
    %v499 = vld [vmem:[%s4 + $0xf0] sm:$0xff]
    %v500 = vld [vmem:[%s4 + $0xf8] sm:$0xff]
    %v501 = vld [vmem:[%s4 + $0x100] sm:$0xff]
    %v502 = vld [vmem:[%s4 + $0x108] sm:$0xff]
    %v503 = vld [vmem:[%s4 + $0x110] sm:$0xff]
    %v504 = vld [vmem:[%s4 + $0x118] sm:$0xff]
    %v505 = vld [vmem:[%s4 + $0x120] sm:$0xff]
    %v506 = vld [vmem:[%s4 + $0x128] sm:$0xff]
    %v507 = vld [vmem:[%s4 + $0x130] sm:$0xff]
    %v508 = vld [vmem:[%s4 + $0x138] sm:$0xff]
    %v509 = vld [vmem:[%s4 + $0x140] sm:$0xff]
    %v510 = vld [vmem:[%s4 + $0x148] sm:$0xff]
    %v511 = vld [vmem:[%s4 + $0x150] sm:$0xff]
    %v512 = vld [vmem:[%s4 + $0x158] sm:$0xff]
    %v513 = vld [vmem:[%s4 + $0x160] sm:$0xff]
    %v514 = vld [vmem:[%s4 + $0x168] sm:$0xff]
    %v515 = vld [vmem:[%s4 + $0x170] sm:$0xff]
    %v516 = vld [vmem:[%s4 + $0x178] sm:$0xff]
    %v517 = vld [vmem:[%s4 + $0x180] sm:$0xff]
    %v518 = vld [vmem:[%s4 + $0x188] sm:$0xff]
    %v519 = vld [vmem:[%s4 + $0x190] sm:$0xff]
    %v520 = vld [vmem:[%s4 + $0x198] sm:$0xff]
    %v521 = vld [vmem:[%s4 + $0x1a0] sm:$0xff]
    %v522 = vld [vmem:[%s4 + $0x1a8] sm:$0xff]
    %v523 = vld [vmem:[%s4 + $0x1b0] sm:$0xff]
    %v524 = vld [vmem:[%s4 + $0x1b8] sm:$0xff]
    %v525 = vld [vmem:[%s4 + $0x1c0] sm:$0xff]
    %v526 = vld [vmem:[%s4 + $0x1c8] sm:$0xff]
    %v527 = vld [vmem:[%s4 + $0x1d0] sm:$0xff]
    %v528 = vld [vmem:[%s4 + $0x1d8] sm:$0xff]
    %v529 = vld [vmem:[%s4 + $0x1e0] sm:$0xff]
    %v530 = vld [vmem:[%s4 + $0x1e8] sm:$0xff]
    %v531 = vld [vmem:[%s4 + $0x1f0] sm:$0xff]
    %v532 = vld [vmem:[%s4 + $0x1f8] sm:$0xff]
    %533 = vmatprep.subr.mxu0 %v470
    %534 = vmatpush1.msra.mxu0 %v469
    %535 = vmatprep.subr.mxu0 %v474
    %536 = vmatpush1.msra.mxu0 %v473
    %537 = vmatprep.subr.mxu0 %v478
    %538 = vmatpush1.msra.mxu0 %v477
    %539 = vmatprep.subr.mxu0 %v482
    %540 = vmatpush1.msra.mxu0 %v481
    %541 = vmatprep.subr.mxu0 %v486
    %542 = vmatpush1.msra.mxu0 %v485
    %543 = vmatprep.subr.mxu0 %v490
    %544 = vmatpush1.msra.mxu0 %v489
    %545 = vmatprep.subr.mxu0 %v494
    %546 = vmatpush1.msra.mxu0 %v493
    %547 = vmatprep.subr.mxu0 %v498
    %548 = vmatpush1.msra.mxu0 %v497
    %549 = vmatprep.subr.mxu0 %v502
    %550 = vmatpush1.msra.mxu0 %v501
    %551 = vmatprep.subr.mxu0 %v506
    %552 = vmatpush1.msra.mxu0 %v505
    %553 = vmatprep.subr.mxu0 %v510
    %554 = vmatpush1.msra.mxu0 %v509
    %555 = vmatprep.subr.mxu0 %v514
    %556 = vmatpush1.msra.mxu0 %v513
    %557 = vmatprep.subr.mxu0 %v518
    %558 = vmatpush1.msra.mxu0 %v517
    %559 = vmatprep.subr.mxu0 %v522
    %560 = vmatpush1.msra.mxu0 %v521
    %561 = vmatprep.subr.mxu0 %v526
    %562 = vmatpush1.msra.mxu0 %v525
    %563 = vmatprep.subr.mxu0 %v530
    %564 = vmatpush1.msra.mxu0 %v529
    %565 = vmatprep.subr.mxu0 0.0
    %566 = vmatpush1.msra.mxu0 0.0
    %567 = vmatprep.subr.mxu0 0.0
    %568 = vmatpush1.msra.mxu0 0.0
    %569 = vmatprep.subr.mxu0 0.0
    %570 = vmatpush1.msra.mxu0 0.0
    %571 = vmatprep.subr.mxu0 0.0
    %572 = vmatpush1.msra.mxu0 0.0
    %573 = vmatprep.subr.mxu0 0.0
    %574 = vmatpush1.msra.mxu0 0.0
    %575 = vmatprep.subr.mxu0 0.0
    %576 = vmatpush1.msra.mxu0 0.0
    %577 = vmatprep.subr.mxu0 0.0
    %578 = vmatpush1.msra.mxu0 0.0
    %579 = vmatprep.subr.mxu0 0.0
    %580 = vmatpush1.msra.mxu0 0.0
    %581 = vmatprep.subr.mxu0 0.0
    %582 = vmatpush1.msra.mxu0 0.0
    %583 = vmatprep.subr.mxu0 0.0
    %584 = vmatpush1.msra.mxu0 0.0
    %585 = vmatprep.subr.mxu0 0.0
    %586 = vmatpush1.msra.mxu0 0.0
    %587 = vmatprep.subr.mxu0 0.0
    %588 = vmatpush1.msra.mxu0 0.0
    %589 = vmatprep.subr.mxu0 0.0
    %590 = vmatpush1.msra.mxu0 0.0
    %591 = vmatprep.subr.mxu0 0.0
    %592 = vmatpush1.msra.mxu0 0.0
    %593 = vmatprep.subr.mxu0 0.0
    %594 = vmatpush1.msra.mxu0 0.0
    %595 = vmatprep.subr.mxu0 0.0
    %596 = vmatpush1.msra.mxu0 0.0
    %597 = vmatprep.mubr.f32.mxu0 0.0
    %598 = vmatmul.mubr.f32.gmra.mrb[0].mxu0 %v467
    %v599 = vpop.f32.mrb[0].mxu0
    %v600 = vadd.f32 0.0, %v599
    %v601 = vpop.f32.mrb[0].mxu0
    %v602 = vadd.f32 0.0, %v601
    %603 = vmatprep.mubr.f32.mxu0 0.0
    %604 = vmatmul.mubr.f32.gmra.mrb[0].mxu0 %v468
    %v605 = vpop.f32.mrb[0].mxu0
    %v606 = vadd.f32 0.0, %v605
    %v607 = vpop.f32.mrb[0].mxu0
    %v608 = vadd.f32 0.0, %v607
    %609 = vdwg.mxu0
    %610 = vmatprep.subr.mxu0 %v472
    %611 = vmatpush1.msra.mxu0 %v471
    %612 = vmatprep.subr.mxu0 %v476
    %613 = vmatpush1.msra.mxu0 %v475
    %614 = vmatprep.subr.mxu0 %v480
    %615 = vmatpush1.msra.mxu0 %v479
    %616 = vmatprep.subr.mxu0 %v484
    %617 = vmatpush1.msra.mxu0 %v483
    %618 = vmatprep.subr.mxu0 %v488
    %619 = vmatpush1.msra.mxu0 %v487
    %620 = vmatprep.subr.mxu0 %v492
    %621 = vmatpush1.msra.mxu0 %v491
    %622 = vmatprep.subr.mxu0 %v496
    %623 = vmatpush1.msra.mxu0 %v495
    %624 = vmatprep.subr.mxu0 %v500
    %625 = vmatpush1.msra.mxu0 %v499
    %626 = vmatprep.subr.mxu0 %v504
    %627 = vmatpush1.msra.mxu0 %v503
    %628 = vmatprep.subr.mxu0 %v508
    %629 = vmatpush1.msra.mxu0 %v507
    %630 = vmatprep.subr.mxu0 %v512
    %631 = vmatpush1.msra.mxu0 %v511
    %632 = vmatprep.subr.mxu0 %v516
    %633 = vmatpush1.msra.mxu0 %v515
    %634 = vmatprep.subr.mxu0 %v520
    %635 = vmatpush1.msra.mxu0 %v519
    %636 = vmatprep.subr.mxu0 %v524
    %637 = vmatpush1.msra.mxu0 %v523
    %638 = vmatprep.subr.mxu0 %v528
    %639 = vmatpush1.msra.mxu0 %v527
    %640 = vmatprep.subr.mxu0 %v532
    %641 = vmatpush1.msra.mxu0 %v531
    %642 = vmatprep.subr.mxu0 0.0
    %643 = vmatpush1.msra.mxu0 0.0
    %644 = vmatprep.subr.mxu0 0.0
    %645 = vmatpush1.msra.mxu0 0.0
    %646 = vmatprep.subr.mxu0 0.0
    %647 = vmatpush1.msra.mxu0 0.0
    %648 = vmatprep.subr.mxu0 0.0
    %649 = vmatpush1.msra.mxu0 0.0
    %650 = vmatprep.subr.mxu0 0.0
    %651 = vmatpush1.msra.mxu0 0.0
    %652 = vmatprep.subr.mxu0 0.0
    %653 = vmatpush1.msra.mxu0 0.0
    %654 = vmatprep.subr.mxu0 0.0
    %655 = vmatpush1.msra.mxu0 0.0
    %656 = vmatprep.subr.mxu0 0.0
    %657 = vmatpush1.msra.mxu0 0.0
    %658 = vmatprep.subr.mxu0 0.0
    %659 = vmatpush1.msra.mxu0 0.0
    %660 = vmatprep.subr.mxu0 0.0
    %661 = vmatpush1.msra.mxu0 0.0
    %662 = vmatprep.subr.mxu0 0.0
    %663 = vmatpush1.msra.mxu0 0.0
    %664 = vmatprep.subr.mxu0 0.0
    %665 = vmatpush1.msra.mxu0 0.0
    %666 = vmatprep.subr.mxu0 0.0
    %667 = vmatpush1.msra.mxu0 0.0
    %668 = vmatprep.subr.mxu0 0.0
    %669 = vmatpush1.msra.mxu0 0.0
    %670 = vmatprep.subr.mxu0 0.0
    %671 = vmatpush1.msra.mxu0 0.0
    %672 = vmatprep.subr.mxu0 0.0
    %673 = vmatpush1.msra.mxu0 0.0
    %674 = vmatprep.mubr.f32.mxu0 0.0
    %675 = vmatmul.mubr.f32.gmra.mrb[0].mxu0 %v467
    %v676 = vpop.f32.mrb[0].mxu0
    %v677 = vadd.f32 0.0, %v676
    %v678 = vpop.f32.mrb[0].mxu0
    %v679 = vadd.f32 0.0, %v678
    %680 = vmatprep.mubr.f32.mxu0 0.0
    %681 = vmatmul.mubr.f32.gmra.mrb[0].mxu0 %v468
    %v682 = vpop.f32.mrb[0].mxu0
    %v683 = vadd.f32 0.0, %v682
    %v684 = vpop.f32.mrb[0].mxu0
    %v685 = vadd.f32 0.0, %v684
    %686 = vdwg.mxu0
    %v687 = vadd.f32 %v459, %v600
    %v688 = vadd.f32 %v460, %v602
    %v689 = vadd.f32 %v461, %v677
    %v690 = vadd.f32 %v462, %v679
    %v691 = vadd.f32 %v463, %v606
    %v692 = vadd.f32 %v464, %v608
    %v693 = vadd.f32 %v465, %v683
    %v694 = vadd.f32 %v466, %v685
    %v695 = vxor.u32 %v687, 2147483648
    %v696 = vxor.u32 %v691, 2147483648
    %v697 = vmul.f32 %v695, 1.442695
    %v698 = vpow.pop %v697
    %v699 = vmul.f32 %v696, 1.442695
    %v700 = vpow.pop %v699
    %v701 = vadd.f32 %v698, 1.0
    %v702 = vadd.f32 %v700, 1.0
    %v703 = vrcp.pop %v701
    %v704 = vmul.f32 1.0, %v703
    %v705 = vrcp.pop %v702
    %v706 = vmul.f32 1.0, %v705
    %v707 = vxor.u32 %v688, 2147483648
    %v708 = vxor.u32 %v692, 2147483648
    %v709 = vmul.f32 %v707, 1.442695
    %v710 = vpow.pop %v709
    %v711 = vmul.f32 %v708, 1.442695
    %v712 = vpow.pop %v711
    %v713 = vadd.f32 %v710, 1.0
    %v714 = vadd.f32 %v712, 1.0
    %v715 = vrcp.pop %v713
    %v716 = vmul.f32 1.0, %v715
    %v717 = vrcp.pop %v714
    %v718 = vmul.f32 1.0, %v717
    %v719 = vtanh.pop %v689
    %v720 = vtanh.pop %v693
    %v721 = vxor.u32 %v690, 2147483648
    %v722 = vxor.u32 %v694, 2147483648
    %v723 = vmul.f32 %v721, 1.442695
    %v724 = vpow.pop %v723
    %v725 = vmul.f32 %v722, 1.442695
    %v726 = vpow.pop %v725
    %v727 = vadd.f32 %v724, 1.0
    %v728 = vadd.f32 %v726, 1.0
    %v729 = vrcp.pop %v727
    %v730 = vmul.f32 1.0, %v729
    %v731 = vrcp.pop %v728
    %v732 = vmul.f32 1.0, %v731
    %v733 = vld [vmem:[#allocation4] sm:$0xff]
    %v734 = vld [vmem:[#allocation4 + $0x8] sm:$0xff]
    %v735 = vmul.f32 %v716, %v733
    %v736 = vmul.f32 %v718, %v734
    %v737 = vmul.f32 %v704, %v719
    %v738 = vmul.f32 %v706, %v720
    %v739 = vadd.f32 %v735, %v737
    %v740 = vadd.f32 %v736, %v738
    %v741 = vtanh.pop %v739
    %v742 = vtanh.pop %v740
    %v743 = vmul.f32 %v730, %v741
    %v744 = vmul.f32 %v732, %v742
    %v745 = vstv %s448
    %vm746 = vcmp.lt.s32.totalorder %v745, %v444
    %vm747 = vcmp.lt.s32.totalorder %v745, %v445
    %v748 = vsel %vm746, 1, 0
    %v749 = vsel %vm747, 1, 0
    %750 = vset.pattern.permute.xlu0 0
    %751 = vperm.xlu0 %750, %v748
    %v752 = vpop.permute.xlu0 %751
    %753 = vset.pattern.permute.xlu0 0
    %754 = vperm.xlu0 %753, %v749
    %v755 = vpop.permute.xlu0 %754
    %vm756 = vcmp.eq.s32.totalorder %v752, 1
    %vm757 = vcmp.eq.s32.totalorder %v755, 1
    %v758 = vsel %vm756, %v739, %v733
    %v759 = vsel %vm757, %v740, %v734
    %760 = vst [vmem:[#allocation4] sm:$0xff] %v758
    %761 = vst [vmem:[#allocation4 + $0x8] sm:$0xff] %v759
    %v762 = vld [vmem:[#allocation3] sm:$0xff]
    %v763 = vld [vmem:[#allocation3 + $0x8] sm:$0xff]
    %v764 = vsel %vm756, %v743, %v762
    %v765 = vsel %vm757, %v744, %v763
    %766 = vst [vmem:[#allocation3] sm:$0xff] %v764
    %767 = vst [vmem:[#allocation3 + $0x8] sm:$0xff] %v765
  $region26: #{embednet2d_forward.1} parent=0 // loop_footer
    %s450 = sadd.s32 %s448, 1
  $region27: #{embednet2d_forward.1} parent=0 // loop_footer_branch
    %447 = sbr.rel target = $region23
  $region28: #{embednet2d_forward.1} parent=0 // loop_exit
    _
  %v768 = vld [vmem:[#allocation3] sm:$0xff]
  %v769 = vld [vmem:[#allocation3 + $0x8] sm:$0xff]
  %770 = vst [vmem:[%s6] sm:$0xff] %v768
  %771 = vst [vmem:[%s6 + $0x8] sm:$0xff] %v769
  // Predicated region
  $region29: #{embednet2d_forward.1} parent=0 // pred_check
    _
  $region30: #{embednet2d_forward.1} parent=0 // pred_check_branch
    %773 = sbr.rel (0) target = $region32
  $region31: #{embednet2d_forward.1} parent=0 // pred_region
    _
  $region32: #{embednet2d_forward.1} parent=0 // pred_fallthru
    _
  // Predicated region
  $region33: #{embednet2d_forward.1} parent=0 // pred_check
    _
  $region34: #{embednet2d_forward.1} parent=0 // pred_check_branch
    %775 = sbr.rel (0) target = $region36
  $region35: #{embednet2d_forward.1} parent=0 // pred_region
    _
  $region36: #{embednet2d_forward.1} parent=0 // pred_fallthru
    _

</llo_original>
